<compile_context>
chip_gen: v5e
topology: v5e:2x2
jax: 0.10.0
libtpu: 0.0.40
codegen_flags: <defaults>
</compile_context>

<pallas_src>
import functools

import jax
import jax.numpy as jnp
from jax import lax
from jax.experimental import pallas as pl
from jax.experimental.pallas import tpu as pltpu


# ----------------------------------------------------------------------------
# Kernels
# ----------------------------------------------------------------------------
def _vae_kernel_train(x_ref, w_ref, b_ref, noise_ref, z_ref, mu_ref, ls_ref,
                      *, cout, cpad, bt):
    w = w_ref[...]                                            # (2*Cp, Cin)
    b = b_ref[...]                                            # (2*Cp, 1)

    def body(i, carry):
        y = jnp.dot(w, x_ref[i], preferred_element_type=jnp.float32) + b
        mu = y[:cout]                                         # (Cout, ts)
        ls = y[cpad:cpad + cout]                              # sublane-aligned
        z_ref[i] = mu + jnp.exp(ls) * noise_ref[i]
        mu_ref[i] = mu
        ls_ref[i] = ls
        return carry

    lax.fori_loop(0, bt, body, 0, unroll=True)


def _vae_kernel_eval(x_ref, w_ref, b_ref, mu_ref, ls_ref, *, cout, cpad, bt):
    w = w_ref[...]
    b = b_ref[...]

    def body(i, carry):
        y = jnp.dot(w, x_ref[i], preferred_element_type=jnp.float32) + b
        mu_ref[i] = y[:cout]
        ls_ref[i] = y[cpad:cpad + cout]
        return carry

    lax.fori_loop(0, bt, body, 0, unroll=True)


# ----------------------------------------------------------------------------
# Tile sizing (memory-bound kernel: maximize bytes / grid step within VMEM)
# ----------------------------------------------------------------------------
def _cdiv(a, b):
    return -(-a // b)


def _choose_tiles(B, S, bytes_per_lane, *, max_tile_s, target_step_bytes,
                  vmem_budget_bytes):
    # Spatial tile: full S when it fits, else largest multiple of 128 lanes.
    if S <= max_tile_s:
        tile_s = S
    else:
        tile_s = max(128, (max_tile_s // 128) * 128)
    # Shrink to respect the double-buffered VMEM budget (single batch elem).
    while tile_s > 128 and 2 * tile_s * bytes_per_lane > vmem_budget_bytes:
        tile_s = max(128, ((tile_s // 2) // 128) * 128)

    # Batch tile: amortize the ~0.35us/step overhead when spatial blocks are
    # small.  bt always divides B.
    bt = 1
    while True:
        nb = bt * 2
        if (nb <= B and B % nb == 0
                and bt * tile_s * bytes_per_lane < target_step_bytes
                and 2 * nb * tile_s * bytes_per_lane <= vmem_budget_bytes):
            bt = nb
        else:
            break

    # Keep >= 2 grid steps for multi-TC chips when there is enough work.
    total_bytes = B * S * bytes_per_lane
    if (B // bt) * _cdiv(S, tile_s) < 2 and total_bytes > (2 << 20):
        if bt > 1:
            bt //= 2
        elif tile_s >= 256:
            tile_s = max(128, ((tile_s // 2) // 128) * 128)
    return bt, tile_s


# ----------------------------------------------------------------------------
# Wrapper
# ----------------------------------------------------------------------------
def vae_bottleneck_pallas(x_nchw, params, noise_nchw=None, *,
                          mean_squash=0.1, std_squash=0.01,
                          training=True,
                          max_tile_s=32768,
                          target_step_bytes=4 << 20,
                          vmem_budget_bytes=24 << 20):
    """Forward pass of VAE_bottleneck.

    x_nchw:     [B, Cin, H, W]  float32
    params:     dict with mu/logstd Conv2dWN params (weight [Cout,Cin,1,1],
                bias [Cout], g [Cout])
    noise_nchw: [B, Cout, H, W] standard-normal noise (used iff training)
    Returns (z, mu, logstd), each [B, Cout, H, W].
    """
    B, Cin, H, W = x_nchw.shape
    Cout = params["mu_g"].shape[0]
    S = H * W
    Cp = _cdiv(Cout, 8) * 8            # sublane-aligned per-head row count

    # ---- parameter glue: weight norm + squash folding + head padding ----
    def wn_weight(w, g, scale):        # w: [Cout, Cin, 1, 1], g: [Cout]
        wnorm = jnp.sqrt(jnp.sum(w * w))
        return (w[:, :, 0, 0] * (g / wnorm)[:, None]) * scale   # [Cout, Cin]

    w_mu = wn_weight(params["mu_w"], params["mu_g"], mean_squash)
    w_ls = wn_weight(params["logstd_w"], params["logstd_g"], std_squash)
    b_mu = params["mu_b"] * mean_squash
    b_ls = params["logstd_b"] * std_squash
    pad = Cp - Cout
    if pad:
        wz = jnp.zeros((pad, Cin), jnp.float32)
        bz = jnp.zeros((pad,), jnp.float32)
        w_cat = jnp.concatenate([w_mu, wz, w_ls, wz], axis=0)
        b_cat = jnp.concatenate([b_mu, bz, b_ls, bz], axis=0)
    else:
        w_cat = jnp.concatenate([w_mu, w_ls], axis=0)
        b_cat = jnp.concatenate([b_mu, b_ls], axis=0)
    w_cat = w_cat.astype(jnp.float32)                           # [2*Cp, Cin]
    b_cat = b_cat.reshape(2 * Cp, 1).astype(jnp.float32)        # [2*Cp, 1]

    # ---- NCHW-native view: free reshape, spatial axis in lanes ----
    x3 = x_nchw.reshape(B, Cin, S).astype(jnp.float32)

    # ---- tile sizing from bytes moved per grid step ----
    n_out = 3 if training else 2
    bytes_per_lane = 4 * (Cin + (Cout if training else 0) + n_out * Cout)
    bt, tile_s = _choose_tiles(
        B, S, bytes_per_lane, max_tile_s=max_tile_s,
        target_step_bytes=target_step_bytes,
        vmem_budget_bytes=vmem_budget_bytes)
    grid = (B // bt, _cdiv(S, tile_s))

    x_spec = pl.BlockSpec((bt, Cin, tile_s), lambda bi, sj: (bi, 0, sj))
    w_spec = pl.BlockSpec((2 * Cp, Cin), lambda bi, sj: (0, 0))
    b_spec = pl.BlockSpec((2 * Cp, 1), lambda bi, sj: (0, 0))
    o_spec = pl.BlockSpec((bt, Cout, tile_s), lambda bi, sj: (bi, 0, sj))
    out_sds = jax.ShapeDtypeStruct((B, Cout, S), jnp.float32)

    # VMEM: double-buffered data blocks + weights + slack; raise scoped limit.
    vmem_need = (2 * bt * tile_s * bytes_per_lane
                 + 4 * (2 * Cp) * (Cin + 1) * 4
                 + (2 << 20))
    vmem_limit = int(min(max(vmem_need, 32 << 20), 48 << 20))

    cost = pl.CostEstimate(
        flops=2 * B * S * Cin * 2 * Cout,
        transcendentals=(B * S * Cout) if training else 0,
        bytes_accessed=B * S * bytes_per_lane + (w_cat.size + b_cat.size) * 4)

    compiler_params = pltpu.CompilerParams(
        dimension_semantics=("parallel", "parallel"),
        vmem_limit_bytes=vmem_limit)

    if training:
        if noise_nchw is None:
            raise ValueError("training=True requires noise")
        noise3 = noise_nchw.reshape(B, Cout, S).astype(jnp.float32)
        kernel = functools.partial(_vae_kernel_train, cout=Cout, cpad=Cp, bt=bt)
        z3, mu3, ls3 = pl.pallas_call(
            kernel,
            out_shape=(out_sds, out_sds, out_sds),
            grid_spec=pltpu.PrefetchScalarGridSpec(
                num_scalar_prefetch=0, grid=grid,
                in_specs=[x_spec, w_spec, b_spec, o_spec],
                out_specs=[o_spec, o_spec, o_spec]),
            compiler_params=compiler_params,
            cost_estimate=cost,
        )(x3, w_cat, b_cat, noise3)
    else:
        # Eval: no noise input and no duplicate z output (z == mu).
        kernel = functools.partial(_vae_kernel_eval, cout=Cout, cpad=Cp, bt=bt)
        mu3, ls3 = pl.pallas_call(
            kernel,
            out_shape=(out_sds, out_sds),
            grid_spec=pltpu.PrefetchScalarGridSpec(
                num_scalar_prefetch=0, grid=grid,
                in_specs=[x_spec, w_spec, b_spec],
                out_specs=[o_spec, o_spec]),
            compiler_params=compiler_params,
            cost_estimate=cost,
        )(x3, w_cat, b_cat)
        z3 = mu3

    shape = (B, Cout, H, W)
    return z3.reshape(shape), mu3.reshape(shape), ls3.reshape(shape)


# ----------------------------------------------------------------------------
# Pure-JAX reference (mirrors the PyTorch forward) for a sanity check
# ----------------------------------------------------------------------------
def vae_bottleneck_ref(x_nchw, params, noise_nchw, *,
                       mean_squash=0.1, std_squash=0.01, training=True):
    def conv_wn(x, w, g, b):
        wnorm = jnp.sqrt(jnp.sum(w * w))
        w_eff = (w * g[:, None, None, None] / wnorm)[:, :, 0, 0]   # [Cout, Cin]
        y = jnp.einsum("bchw,oc->bohw", x, w_eff)
        return y + b[None, :, None, None]

    mu = conv_wn(x_nchw, params["mu_w"], params["mu_g"], params["mu_b"]) * mean_squash
    ls = conv_wn(x_nchw, params["logstd_w"], params["logstd_g"], params["logstd_b"]) * std_squash
    z = mu + jnp.exp(ls) * noise_nchw if training else mu
    return z, mu, ls


if __name__ == "__main__":
    key = jax.random.PRNGKey(0)
    B, Cin, H, W = 2, 4, 16, 16
    Cout = 8
    k_x, k_wm, k_wl, k_bm, k_bl, k_n = jax.random.split(key, 6)

    x = jax.random.normal(k_x, (B, Cin, H, W), jnp.float32)
    params = {
        # Conv2dWN parameters: weight [Cout, Cin, 1, 1], bias [Cout], g [Cout]
        "mu_w": jax.random.normal(k_wm, (Cout, Cin, 1, 1), jnp.float32) * 0.1,
        "mu_b": jax.random.normal(k_bm, (Cout,), jnp.float32) * 0.01,
        "mu_g": jnp.ones((Cout,), jnp.float32),
        "logstd_w": jax.random.normal(k_wl, (Cout, Cin, 1, 1), jnp.float32) * 0.1,
        "logstd_b": jax.random.normal(k_bl, (Cout,), jnp.float32) * 0.01,
        "logstd_g": jnp.ones((Cout,), jnp.float32),
    }
    # torch.randn equivalent noise for the reparameterization trick
    noise = jax.random.normal(k_n, (B, Cout, H, W), jnp.float32)

    # --- training mode ---
    z, mu, logstd = vae_bottleneck_pallas(
        x, params, noise, mean_squash=0.1, std_squash=0.01, training=True)
    jax.block_until_ready((z, mu, logstd))

    z_r, mu_r, ls_r = vae_bottleneck_ref(
        x, params, noise, mean_squash=0.1, std_squash=0.01, training=True)

    assert z.shape == (B, Cout, H, W) and mu.shape == (B, Cout, H, W)
    assert jnp.allclose(z, z_r, atol=1e-5, rtol=1e-5)
    assert jnp.allclose(mu, mu_r, atol=1e-5, rtol=1e-5)
    assert jnp.allclose(logstd, ls_r, atol=1e-5, rtol=1e-5)

    # --- eval mode (no noise input, no z output; z == mu) ---
    z_e, mu_e, ls_e = vae_bottleneck_pallas(
        x, params, mean_squash=0.1, std_squash=0.01, training=False)
    jax.block_until_ready((z_e, mu_e, ls_e))
    assert jnp.allclose(z_e, mu_r, atol=1e-5, rtol=1e-5)
    assert jnp.allclose(mu_e, mu_r, atol=1e-5, rtol=1e-5)
    assert jnp.allclose(ls_e, ls_r, atol=1e-5, rtol=1e-5)

    print("KERNEL_OK")
</pallas_src>

<mosaic_0001>
module attributes {stable_mosaic.version = 11 : i64} {
  func.func @_vae_kernel_train(%arg0: i32, %arg1: i32, %arg2: memref<2x4x256xf32, #tpu.memory_space<vmem>>, %arg3: memref<16x4xf32, #tpu.memory_space<vmem>>, %arg4: memref<16x1xf32, #tpu.memory_space<vmem>>, %arg5: memref<2x8x256xf32, #tpu.memory_space<vmem>>, %arg6: memref<2x8x256xf32, #tpu.memory_space<vmem>>, %arg7: memref<2x8x256xf32, #tpu.memory_space<vmem>>, %arg8: memref<2x8x256xf32, #tpu.memory_space<vmem>>) attributes {dimension_semantics = [#tpu.dimension_semantics<parallel>, #tpu.dimension_semantics<parallel>], iteration_bounds = array<i64: 1, 1>, scalar_prefetch = 0 : i64, scratch_operands = 0 : i64, tpu.core_type = #tpu.core_type<tc>, window_params = [{transform_indices = @transform_0, window_bounds = array<i64: 2, 4, 256>}, {pipeline_mode = #tpu.pipeline_mode<synchronous>, transform_indices = @transform_1, window_bounds = array<i64: 16, 4>}, {pipeline_mode = #tpu.pipeline_mode<synchronous>, transform_indices = @transform_2, window_bounds = array<i64: 16, 1>}, {transform_indices = @transform_3, window_bounds = array<i64: 2, 8, 256>}, {transform_indices = @transform_4, window_bounds = array<i64: 2, 8, 256>}, {transform_indices = @transform_5, window_bounds = array<i64: 2, 8, 256>}, {transform_indices = @transform_6, window_bounds = array<i64: 2, 8, 256>}]} {
    %c0 = arith.constant 0 : index
    %c0_0 = arith.constant 0 : index
    %0 = vector.load %arg3[%c0, %c0_0] : memref<16x4xf32, #tpu.memory_space<vmem>>, vector<16x4xf32>
    %c0_1 = arith.constant 0 : index
    %c0_2 = arith.constant 0 : index
    %1 = vector.load %arg4[%c0_1, %c0_2] : memref<16x1xf32, #tpu.memory_space<vmem>>, vector<16x1xf32>
    %c0_i32 = arith.constant 0 : i32
    %2 = arith.index_cast %c0_i32 : i32 to index
    %c0_3 = arith.constant 0 : index
    %c0_4 = arith.constant 0 : index
    %3 = vector.load %arg2[%2, %c0_3, %c0_4] : memref<2x4x256xf32, #tpu.memory_space<vmem>>, vector<1x4x256xf32>
    %4 = vector.shape_cast %3 : vector<1x4x256xf32> to vector<4x256xf32>
    %cst = arith.constant dense<0.000000e+00> : vector<16x256xf32>
    %5 = tpu.matmul %0, %4, %cst {dimension_numbers = #tpu.dot_dimension_numbers<[1], [0], [0], [1], [0, 0, 1, 1], [], []>} : vector<16x4xf32>, vector<4x256xf32>, vector<16x256xf32> -> vector<16x256xf32>
    %6 = vector.broadcast %1 : vector<16x1xf32> to vector<16x256xf32>
    %7 = arith.addf %5, %6 : vector<16x256xf32>
    %8 = vector.extract_strided_slice %7 {offsets = [0, 0], sizes = [8, 256], strides = [1, 1]} : vector<16x256xf32> to vector<8x256xf32>
    %9 = vector.extract_strided_slice %7 {offsets = [8, 0], sizes = [8, 256], strides = [1, 1]} : vector<16x256xf32> to vector<8x256xf32>
    %10 = math.exp %9 : vector<8x256xf32>
    %11 = arith.index_cast %c0_i32 : i32 to index
    %c0_5 = arith.constant 0 : index
    %c0_6 = arith.constant 0 : index
    %12 = vector.load %arg5[%11, %c0_5, %c0_6] : memref<2x8x256xf32, #tpu.memory_space<vmem>>, vector<1x8x256xf32>
    %13 = vector.shape_cast %12 : vector<1x8x256xf32> to vector<8x256xf32>
    %14 = arith.mulf %10, %13 : vector<8x256xf32>
    %15 = arith.addf %8, %14 : vector<8x256xf32>
    %16 = arith.index_cast %c0_i32 : i32 to index
    %c0_7 = arith.constant 0 : index
    %c0_8 = arith.constant 0 : index
    %17 = vector.load %arg6[%16, %c0_7, %c0_8] : memref<2x8x256xf32, #tpu.memory_space<vmem>>, vector<1x8x256xf32>
    %18 = vector.shape_cast %17 : vector<1x8x256xf32> to vector<8x256xf32>
    %19 = vector.shape_cast %15 : vector<8x256xf32> to vector<1x8x256xf32>
    tpu.vector_store %arg6[%16, %c0_7, %c0_8], %19 {strides = array<i32>} : memref<2x8x256xf32, #tpu.memory_space<vmem>>, vector<1x8x256xf32>,
    %20 = arith.index_cast %c0_i32 : i32 to index
    %c0_9 = arith.constant 0 : index
    %c0_10 = arith.constant 0 : index
    %21 = vector.load %arg7[%20, %c0_9, %c0_10] : memref<2x8x256xf32, #tpu.memory_space<vmem>>, vector<1x8x256xf32>
    %22 = vector.shape_cast %21 : vector<1x8x256xf32> to vector<8x256xf32>
    %23 = vector.shape_cast %8 : vector<8x256xf32> to vector<1x8x256xf32>
    tpu.vector_store %arg7[%20, %c0_9, %c0_10], %23 {strides = array<i32>} : memref<2x8x256xf32, #tpu.memory_space<vmem>>, vector<1x8x256xf32>,
    %24 = arith.index_cast %c0_i32 : i32 to index
    %c0_11 = arith.constant 0 : index
    %c0_12 = arith.constant 0 : index
    %25 = vector.load %arg8[%24, %c0_11, %c0_12] : memref<2x8x256xf32, #tpu.memory_space<vmem>>, vector<1x8x256xf32>
    %26 = vector.shape_cast %25 : vector<1x8x256xf32> to vector<8x256xf32>
    %27 = vector.shape_cast %9 : vector<8x256xf32> to vector<1x8x256xf32>
    tpu.vector_store %arg8[%24, %c0_11, %c0_12], %27 {strides = array<i32>} : memref<2x8x256xf32, #tpu.memory_space<vmem>>, vector<1x8x256xf32>,
    %c1_i32 = arith.constant 1 : i32
    %28 = arith.index_cast %c1_i32 : i32 to index
    %c0_13 = arith.constant 0 : index
    %c0_14 = arith.constant 0 : index
    %29 = vector.load %arg2[%28, %c0_13, %c0_14] : memref<2x4x256xf32, #tpu.memory_space<vmem>>, vector<1x4x256xf32>
    %30 = vector.shape_cast %29 : vector<1x4x256xf32> to vector<4x256xf32>
    %cst_15 = arith.constant dense<0.000000e+00> : vector<16x256xf32>
    %31 = tpu.matmul %0, %30, %cst_15 {dimension_numbers = #tpu.dot_dimension_numbers<[1], [0], [0], [1], [0, 0, 1, 1], [], []>} : vector<16x4xf32>, vector<4x256xf32>, vector<16x256xf32> -> vector<16x256xf32>
    %32 = vector.broadcast %1 : vector<16x1xf32> to vector<16x256xf32>
    %33 = arith.addf %31, %32 : vector<16x256xf32>
    %34 = vector.extract_strided_slice %33 {offsets = [0, 0], sizes = [8, 256], strides = [1, 1]} : vector<16x256xf32> to vector<8x256xf32>
    %35 = vector.extract_strided_slice %33 {offsets = [8, 0], sizes = [8, 256], strides = [1, 1]} : vector<16x256xf32> to vector<8x256xf32>
    %36 = math.exp %35 : vector<8x256xf32>
    %37 = arith.index_cast %c1_i32 : i32 to index
    %c0_16 = arith.constant 0 : index
    %c0_17 = arith.constant 0 : index
    %38 = vector.load %arg5[%37, %c0_16, %c0_17] : memref<2x8x256xf32, #tpu.memory_space<vmem>>, vector<1x8x256xf32>
    %39 = vector.shape_cast %38 : vector<1x8x256xf32> to vector<8x256xf32>
    %40 = arith.mulf %36, %39 : vector<8x256xf32>
    %41 = arith.addf %34, %40 : vector<8x256xf32>
    %42 = arith.index_cast %c1_i32 : i32 to index
    %c0_18 = arith.constant 0 : index
    %c0_19 = arith.constant 0 : index
    %43 = vector.load %arg6[%42, %c0_18, %c0_19] : memref<2x8x256xf32, #tpu.memory_space<vmem>>, vector<1x8x256xf32>
    %44 = vector.shape_cast %43 : vector<1x8x256xf32> to vector<8x256xf32>
    %45 = vector.shape_cast %41 : vector<8x256xf32> to vector<1x8x256xf32>
    tpu.vector_store %arg6[%42, %c0_18, %c0_19], %45 {strides = array<i32>} : memref<2x8x256xf32, #tpu.memory_space<vmem>>, vector<1x8x256xf32>,
    %46 = arith.index_cast %c1_i32 : i32 to index
    %c0_20 = arith.constant 0 : index
    %c0_21 = arith.constant 0 : index
    %47 = vector.load %arg7[%46, %c0_20, %c0_21] : memref<2x8x256xf32, #tpu.memory_space<vmem>>, vector<1x8x256xf32>
    %48 = vector.shape_cast %47 : vector<1x8x256xf32> to vector<8x256xf32>
    %49 = vector.shape_cast %34 : vector<8x256xf32> to vector<1x8x256xf32>
    tpu.vector_store %arg7[%46, %c0_20, %c0_21], %49 {strides = array<i32>} : memref<2x8x256xf32, #tpu.memory_space<vmem>>, vector<1x8x256xf32>,
    %50 = arith.index_cast %c1_i32 : i32 to index
    %c0_22 = arith.constant 0 : index
    %c0_23 = arith.constant 0 : index
    %51 = vector.load %arg8[%50, %c0_22, %c0_23] : memref<2x8x256xf32, #tpu.memory_space<vmem>>, vector<1x8x256xf32>
    %52 = vector.shape_cast %51 : vector<1x8x256xf32> to vector<8x256xf32>
    %53 = vector.shape_cast %35 : vector<8x256xf32> to vector<1x8x256xf32>
    tpu.vector_store %arg8[%50, %c0_22, %c0_23], %53 {strides = array<i32>} : memref<2x8x256xf32, #tpu.memory_space<vmem>>, vector<1x8x256xf32>,
    %c2_i32 = arith.constant 2 : i32
    return
  }
  func.func @transform_0(%arg0: i32, %arg1: i32) -> (i32, i32, i32) {
    %c0_i32 = arith.constant 0 : i32
    %c0_i32_0 = arith.constant 0 : i32
    return %arg0, %c0_i32, %arg1 : i32, i32, i32
  }
  func.func @transform_1(%arg0: i32, %arg1: i32) -> (i32, i32) {
    %c0_i32 = arith.constant 0 : i32
    %c0_i32_0 = arith.constant 0 : i32
    %c0_i32_1 = arith.constant 0 : i32
    return %c0_i32, %c0_i32_0 : i32, i32
  }
  func.func @transform_2(%arg0: i32, %arg1: i32) -> (i32, i32) {
    %c0_i32 = arith.constant 0 : i32
    %c0_i32_0 = arith.constant 0 : i32
    %c0_i32_1 = arith.constant 0 : i32
    return %c0_i32, %c0_i32_0 : i32, i32
  }
  func.func @transform_3(%arg0: i32, %arg1: i32) -> (i32, i32, i32) {
    %c0_i32 = arith.constant 0 : i32
    %c0_i32_0 = arith.constant 0 : i32
    return %arg0, %c0_i32, %arg1 : i32, i32, i32
  }
  func.func @transform_4(%arg0: i32, %arg1: i32) -> (i32, i32, i32) {
    %c0_i32 = arith.constant 0 : i32
    %c0_i32_0 = arith.constant 0 : i32
    return %arg0, %c0_i32, %arg1 : i32, i32, i32
  }
  func.func @transform_5(%arg0: i32, %arg1: i32) -> (i32, i32, i32) {
    %c0_i32 = arith.constant 0 : i32
    %c0_i32_0 = arith.constant 0 : i32
    return %arg0, %c0_i32, %arg1 : i32, i32, i32
  }
  func.func @transform_6(%arg0: i32, %arg1: i32) -> (i32, i32, i32) {
    %c0_i32 = arith.constant 0 : i32
    %c0_i32_0 = arith.constant 0 : i32
    return %arg0, %c0_i32, %arg1 : i32, i32, i32
  }
}

</mosaic_0001>

<llo_original>
// kernel: tpu_custom_call.1
$region0: #{tpu_custom_call.1}
  #allocation0 [shape = 'u32[]', space=smem, size = 0x4, offset = 0x4, fixed_abs, tag = 'smem constant byte address 0x4 - core index']
  #allocation1 [shape = 'u32[72,128]{1,0:T(1,128)}', space=vmem, size = 0x9000, scoped, tag = 'internal scratch']
  %s0 = inlined_call_operand.hbm [shape: f32[2,4,256], index: 0, kind: input, shape index: {}]
  %s1 = inlined_call_operand.vmem [shape: f32[16,4], index: 1, kind: input, shape index: {}]
  %s2 = inlined_call_operand.vmem [shape: f32[16,1], index: 2, kind: input, shape index: {}]
  %s3 = inlined_call_operand.vmem [shape: f32[2,8,256], index: 3, kind: input, shape index: {}]
  %s4 = inlined_call_operand.hbm [shape: f32[2,8,256], index: 4, kind: output, shape index: {0}]
  %s5 = inlined_call_operand.hbm [shape: f32[2,8,256], index: 5, kind: output, shape index: {1}]
  %s6 = inlined_call_operand.hbm [shape: f32[2,8,256], index: 6, kind: output, shape index: {2}]
  %7 = xla_tuple %s4, %s5, %s6
  %s8 = sld [smem:[#allocation0]]
  $region46: #{tpu_custom_call.1} parent=0
    _
  %s10 = ssub.s32 1, %s8
  %s11 = scalar_select 0, %s10, %s8
  $region1: #{tpu_custom_call.1} parent=0
    #allocation2 [shape = 'u8[8192]{0}', space=vmem, size = 0x2000, scoped, tag = 'input window, operand 0, single buffered']
    #allocation3 [shape = 's32[1]{0}', space=sflag, size = 0x4, scoped, tag = 'scoped memory for tpu_custom_call.1']
    #allocation4 [shape = 's32[1]{0}', space=sflag, size = 0x4, scoped, tag = 'scoped memory for tpu_custom_call.1']
    #allocation5 [shape = 'u8[16384]{0}', space=vmem, size = 0x4000, scoped, tag = 'output window, operand 0, single buffered']
    #allocation6 [shape = 'u8[16384]{0}', space=vmem, size = 0x4000, scoped, tag = 'output window, operand 1, single buffered']
    #allocation7 [shape = 's32[1]{0}', space=sflag, size = 0x4, scoped, tag = 'scoped memory for tpu_custom_call.1']
    #allocation8 [shape = 'u8[16384]{0}', space=vmem, size = 0x4000, scoped, tag = 'output window, operand 2, single buffered']
    %12 = vsyncpa [#allocation3], 0
    %13 = vsyncpa [#allocation4], 0
    %14 = vsyncpa [#allocation7], 0
    // Predicated region
    $region2: #{tpu_custom_call.1} parent=1 // pred_check
      _
    $region3: #{tpu_custom_call.1} parent=1 // pred_check_branch
      %16 = sbr.rel (0) target = $region5
    $region4: #{tpu_custom_call.1} parent=1 // pred_region
      %18 = vsyncadd [#allocation3], 0
      %s19 = sshll.u32 %s0, 4
      %s20 = int_to_ptr.hbm [resolvable:$true] %s19
      %s21 = sshll.u32 [#allocation2], 4
      %s22 = int_to_ptr.vmem [resolvable:$true] %s21
      %27 = dma.hbm_to_vmem [thread:$0]  %s20, 256, %s22, [#allocation3], 128, 128, 8
    $region5: #{tpu_custom_call.1} parent=1 // pred_fallthru
      _
    // Predicated region
    $region6: #{tpu_custom_call.1} parent=1 // pred_check
      _
    $region7: #{tpu_custom_call.1} parent=1 // pred_check_branch
      %29 = sbr.rel (0) target = $region9
    $region8: #{tpu_custom_call.1} parent=1 // pred_region
      _
    $region9: #{tpu_custom_call.1} parent=1 // pred_fallthru
      _
    // Predicated region
    $region10: #{tpu_custom_call.1} parent=1 // pred_check
      _
    $region11: #{tpu_custom_call.1} parent=1 // pred_check_branch
      %31 = sbr.rel (0) target = $region13
    $region12: #{tpu_custom_call.1} parent=1 // pred_region
      _
    $region13: #{tpu_custom_call.1} parent=1 // pred_fallthru
      _
    // Predicated region
    $region14: #{tpu_custom_call.1} parent=1 // pred_check
      _
    $region15: #{tpu_custom_call.1} parent=1 // pred_check_branch
      %33 = sbr.rel (0) target = $region17
    $region16: #{tpu_custom_call.1} parent=1 // pred_region
      _
    $region17: #{tpu_custom_call.1} parent=1 // pred_fallthru
      _
    // Predicated region
    $region18: #{tpu_custom_call.1} parent=1 // pred_check
      _
    $region19: #{tpu_custom_call.1} parent=1 // pred_check_branch
      %35 = sbr.rel (0) target = $region21
    $region20: #{tpu_custom_call.1} parent=1 // pred_region
      %37 = dma.done [#allocation3], 256
    $region21: #{tpu_custom_call.1} parent=1 // pred_fallthru
      _
    %v38 = vld [vmem:[%s1] sm:$0xff]
    %v39 = vld [vmem:[%s1 + $0x8] sm:$0xff]
    %v40 = vld [vmem:[%s2] sm:$0xff]
    %v41 = vld [vmem:[%s2 + $0x8] sm:$0xff]
    %v42 = vld [vmem:[#allocation2] sm:$0xff]
    %44 = vset.pattern.permute.xlu0 0
    %45 = vperm.xlu0 %44, %v40
    %v46 = vpop.permute.xlu0 %45
    %49 = vset.pattern.permute.xlu0 0
    %50 = vperm.xlu0 %49, %v41
    %v51 = vpop.permute.xlu0 %50
    %54 = vst [vmem:[#allocation1] ss:$2 sm:$0xff] %v42
    %v55 = vld.sshfl [vmem:[#allocation1] sm:$0xff pattern:$0x75316420]
    %v56 = vld.sshfl [vmem:[#allocation1 + $0x8] sm:$0xff pattern:$0x75316420]
    %vm57 = vcmask 31744
    %v59 = vsel %vm57, %v38, 0
    %v62 = vsel %vm57, %v39, 0
    %vm64 = vcmask 1043456
    %v65 = vsel %vm64, %v55, 0
    %v67 = vsel %vm64, %v56, 0
    %69 = vmatpush.msra.mxu0 0.0
    %70 = vmatpush.msra.mxu0 0.0
    %71 = vmatpush.msra.mxu0 0.0
    %72 = vmatpush.msra.mxu0 0.0
    %73 = vmatpush.msra.mxu0 0.0
    %74 = vmatpush.msra.mxu0 0.0
    %75 = vmatpush.msra.mxu0 0.0
    %76 = vmatpush.msra.mxu0 0.0
    %77 = vmatpush.msra.mxu0 0.0
    %78 = vmatpush.msra.mxu0 0.0
    %79 = vmatpush.msra.mxu0 0.0
    %80 = vmatpush.msra.mxu0 0.0
    %81 = vmatpush.msra.mxu0 0.0
    %82 = vmatpush.msra.mxu0 0.0
    %83 = vmatpush.msra.mxu0 0.0
    %84 = vmatpush.msra.mxu0 %v65
    %85 = vmatmul.f32.gmra.mxu0 %v59
    %v86 = vpop.f32.mrf.mxu0
    %v87 = vadd.f32 %v46, %v86
    %88 = vmatmul.f32.gmra.mxu0 %v62
    %v89 = vpop.f32.mrf.mxu0
    %v90 = vadd.f32 %v51, %v89
    %91 = vdwg.mxu0
    %92 = vmatpush.msra.mxu0 0.0
    %93 = vmatpush.msra.mxu0 0.0
    %94 = vmatpush.msra.mxu0 0.0
    %95 = vmatpush.msra.mxu0 0.0
    %96 = vmatpush.msra.mxu0 0.0
    %97 = vmatpush.msra.mxu0 0.0
    %98 = vmatpush.msra.mxu0 0.0
    %99 = vmatpush.msra.mxu0 0.0
    %100 = vmatpush.msra.mxu0 0.0
    %101 = vmatpush.msra.mxu0 0.0
    %102 = vmatpush.msra.mxu0 0.0
    %103 = vmatpush.msra.mxu0 0.0
    %104 = vmatpush.msra.mxu0 0.0
    %105 = vmatpush.msra.mxu0 0.0
    %106 = vmatpush.msra.mxu0 0.0
    %107 = vmatpush.msra.mxu0 %v67
    %108 = vmatmul.f32.gmra.mxu0 %v59
    %v109 = vpop.f32.mrf.mxu0
    %v110 = vadd.f32 %v46, %v109
    %111 = vmatmul.f32.gmra.mxu0 %v62
    %v112 = vpop.f32.mrf.mxu0
    %v113 = vadd.f32 %v51, %v112
    %114 = vdwg.mxu0
    %v115 = vmul.f32 %v90, 1.442695
    %v116 = vpow.pop %v115
    %v117 = vmul.f32 %v113, 1.442695
    %v118 = vpow.pop %v117
    %v119 = vld [vmem:[%s3] sm:$0xff]
    %v120 = vld [vmem:[%s3 + $0x8] sm:$0xff]
    %v121 = vmul.f32 %v116, %v119
    %v122 = vmul.f32 %v118, %v120
    %v123 = vadd.f32 %v87, %v121
    %v124 = vadd.f32 %v110, %v122
    %125 = vst [vmem:[#allocation5] sm:$0xff] %v123
    %126 = vst [vmem:[#allocation5 + $0x8] sm:$0xff] %v124
    %127 = vst [vmem:[#allocation6] sm:$0xff] %v87
    %128 = vst [vmem:[#allocation6 + $0x8] sm:$0xff] %v110
    %129 = vst [vmem:[#allocation8] sm:$0xff] %v90
    %130 = vst [vmem:[#allocation8 + $0x8] sm:$0xff] %v113
    %s131 = scalar_lea.vmem [#allocation2], 8
    %v132 = vld [vmem:[%s131] sm:$0xff]
    %134 = vst [vmem:[#allocation1] ss:$2 sm:$0xff] %v132
    %v135 = vld.sshfl [vmem:[#allocation1] sm:$0xff pattern:$0x75316420]
    %v136 = vld.sshfl [vmem:[#allocation1 + $0x8] sm:$0xff pattern:$0x75316420]
    %v137 = vsel %vm64, %v135, 0
    %v139 = vsel %vm64, %v136, 0
    %141 = vmatpush.msra.mxu0 0.0
    %142 = vmatpush.msra.mxu0 0.0
    %143 = vmatpush.msra.mxu0 0.0
    %144 = vmatpush.msra.mxu0 0.0
    %145 = vmatpush.msra.mxu0 0.0
    %146 = vmatpush.msra.mxu0 0.0
    %147 = vmatpush.msra.mxu0 0.0
    %148 = vmatpush.msra.mxu0 0.0
    %149 = vmatpush.msra.mxu0 0.0
    %150 = vmatpush.msra.mxu0 0.0
    %151 = vmatpush.msra.mxu0 0.0
    %152 = vmatpush.msra.mxu0 0.0
    %153 = vmatpush.msra.mxu0 0.0
    %154 = vmatpush.msra.mxu0 0.0
    %155 = vmatpush.msra.mxu0 0.0
    %156 = vmatpush.msra.mxu0 %v137
    %157 = vmatmul.f32.gmra.mxu0 %v59
    %v158 = vpop.f32.mrf.mxu0
    %v159 = vadd.f32 %v46, %v158
    %160 = vmatmul.f32.gmra.mxu0 %v62
    %v161 = vpop.f32.mrf.mxu0
    %v162 = vadd.f32 %v51, %v161
    %163 = vdwg.mxu0
    %164 = vmatpush.msra.mxu0 0.0
    %165 = vmatpush.msra.mxu0 0.0
    %166 = vmatpush.msra.mxu0 0.0
    %167 = vmatpush.msra.mxu0 0.0
    %168 = vmatpush.msra.mxu0 0.0
    %169 = vmatpush.msra.mxu0 0.0
    %170 = vmatpush.msra.mxu0 0.0
    %171 = vmatpush.msra.mxu0 0.0
    %172 = vmatpush.msra.mxu0 0.0
    %173 = vmatpush.msra.mxu0 0.0
    %174 = vmatpush.msra.mxu0 0.0
    %175 = vmatpush.msra.mxu0 0.0
    %176 = vmatpush.msra.mxu0 0.0
    %177 = vmatpush.msra.mxu0 0.0
    %178 = vmatpush.msra.mxu0 0.0
    %179 = vmatpush.msra.mxu0 %v139
    %180 = vmatmul.f32.gmra.mxu0 %v59
    %v181 = vpop.f32.mrf.mxu0
    %v182 = vadd.f32 %v46, %v181
    %183 = vmatmul.f32.gmra.mxu0 %v62
    %v184 = vpop.f32.mrf.mxu0
    %v185 = vadd.f32 %v51, %v184
    %186 = vdwg.mxu0
    %v187 = vmul.f32 %v162, 1.442695
    %v188 = vpow.pop %v187
    %v189 = vmul.f32 %v185, 1.442695
    %v190 = vpow.pop %v189
    %s191 = scalar_lea.vmem %s3, 16
    %v192 = vld [vmem:[%s191] sm:$0xff]
    %v193 = vld [vmem:[%s191 + $0x8] sm:$0xff]
    %v194 = vmul.f32 %v188, %v192
    %v195 = vmul.f32 %v190, %v193
    %v196 = vadd.f32 %v159, %v194
    %v197 = vadd.f32 %v182, %v195
    %s198 = scalar_lea.vmem [#allocation5], 16
    %199 = vst [vmem:[%s198] sm:$0xff] %v196
    %200 = vst [vmem:[%s198 + $0x8] sm:$0xff] %v197
    %s201 = scalar_lea.vmem [#allocation6], 16
    %202 = vst [vmem:[%s201] sm:$0xff] %v159
    %203 = vst [vmem:[%s201 + $0x8] sm:$0xff] %v182
    %s204 = scalar_lea.vmem [#allocation8], 16
    %205 = vst [vmem:[%s204] sm:$0xff] %v162
    %206 = vst [vmem:[%s204 + $0x8] sm:$0xff] %v185
    // Predicated region
    $region22: #{tpu_custom_call.1} parent=1 // pred_check
      _
    $region23: #{tpu_custom_call.1} parent=1 // pred_check_branch
      %208 = sbr.rel (0) target = $region25
    $region24: #{tpu_custom_call.1} parent=1 // pred_region
      %210 = vsyncadd [#allocation4], 0
      %s211 = sshll.u32 [#allocation5], 4
      %s212 = int_to_ptr.vmem [resolvable:$true] %s211
      %s213 = sshll.u32 %s4, 4
      %s214 = int_to_ptr.hbm [resolvable:$true] %s213
      %219 = dma.vmem_to_hbm [thread:$0]  %s212, 512, %s214, [#allocation4], 256, 256, 16
    $region25: #{tpu_custom_call.1} parent=1 // pred_fallthru
      _
    // Predicated region
    $region26: #{tpu_custom_call.1} parent=1 // pred_check
      _
    $region27: #{tpu_custom_call.1} parent=1 // pred_check_branch
      %221 = sbr.rel (0) target = $region29
    $region28: #{tpu_custom_call.1} parent=1 // pred_region
      %223 = vsyncadd [#allocation7], 0
      %s224 = sshll.u32 [#allocation6], 4
      %s225 = int_to_ptr.vmem [resolvable:$true] %s224
      %s226 = sshll.u32 %s5, 4
      %s227 = int_to_ptr.hbm [resolvable:$true] %s226
      %232 = dma.vmem_to_hbm [thread:$0]  %s225, 512, %s227, [#allocation7], 256, 256, 16
    $region29: #{tpu_custom_call.1} parent=1 // pred_fallthru
      _
    // Predicated region
    $region30: #{tpu_custom_call.1} parent=1 // pred_check
      _
    $region31: #{tpu_custom_call.1} parent=1 // pred_check_branch
      %234 = sbr.rel (0) target = $region33
    $region32: #{tpu_custom_call.1} parent=1 // pred_region
      %236 = vsyncadd [#allocation7], 0
      %s237 = sshll.u32 [#allocation8], 4
      %s238 = int_to_ptr.vmem [resolvable:$true] %s237
      %s239 = sshll.u32 %s6, 4
      %s240 = int_to_ptr.hbm [resolvable:$true] %s239
      %245 = dma.vmem_to_hbm [thread:$0]  %s238, 512, %s240, [#allocation7], 256, 256, 16
    $region33: #{tpu_custom_call.1} parent=1 // pred_fallthru
      _
    // Predicated region
    $region34: #{tpu_custom_call.1} parent=1 // pred_check
      _
    $region35: #{tpu_custom_call.1} parent=1 // pred_check_branch
      %247 = sbr.rel (0) target = $region37
    $region36: #{tpu_custom_call.1} parent=1 // pred_region
      %249 = dma.done [#allocation4], 512
    $region37: #{tpu_custom_call.1} parent=1 // pred_fallthru
      _
    // Predicated region
    $region38: #{tpu_custom_call.1} parent=1 // pred_check
      _
    $region39: #{tpu_custom_call.1} parent=1 // pred_check_branch
      %251 = sbr.rel (0) target = $region41
    $region40: #{tpu_custom_call.1} parent=1 // pred_region
      %253 = dma.done [#allocation7], 512
    $region41: #{tpu_custom_call.1} parent=1 // pred_fallthru
      _
    // Predicated region
    $region42: #{tpu_custom_call.1} parent=1 // pred_check
      _
    $region43: #{tpu_custom_call.1} parent=1 // pred_check_branch
      %255 = sbr.rel (0) target = $region45
    $region44: #{tpu_custom_call.1} parent=1 // pred_region
      %257 = dma.done [#allocation7], 512
    $region45: #{tpu_custom_call.1} parent=1 // pred_fallthru
      _
    %258 = vsyncpa [#allocation3], 1
    %259 = vsyncpa [#allocation4], 1
    %260 = vsyncpa [#allocation7], 1

</llo_original>
